<compile_context>
chip_gen: v7x
topology: tpu7x:2x2x1
jax: 0.10.0
libtpu: 0.0.40
codegen_flags: <defaults>
</compile_context>

<pallas_src>
import functools
import math

import jax
import jax.numpy as jnp
from jax.experimental import pallas as pl
from jax.experimental.pallas import tpu as pltpu


def _round_up(x, m):
    return (x + m - 1) // m * m


def metanet_kernel(hx_ref, y_ref, w1_ref, embw1_ref, b1_ref, w2_ref, b2_ref,
                   w3_ref, b3_ref, out_ref, *, approx_recip):
    cdt = w1_ref.dtype                 # compute dtype for the MXU operands (f32 or bf16)
    tb = hx_ref.shape[0]
    nc_pad = embw1_ref.shape[0]

    # Fused embedding lookup: one-hot(y) @ (cls_emb @ W1_cls)  ==  cls_emb[y] @ W1_cls
    y_col = y_ref[...]                                               # [TB, 1] int32
    classes = jax.lax.broadcasted_iota(jnp.int32, (tb, nc_pad), 1)   # [TB, NC_PAD]
    onehot = (y_col == classes).astype(cdt)

    h1 = jnp.tanh(
        jnp.dot(hx_ref[...].astype(cdt), w1_ref[...], preferred_element_type=jnp.float32)
        + jnp.dot(onehot, embw1_ref[...], preferred_element_type=jnp.float32)
        + b1_ref[...]
    )
    h2 = jnp.tanh(
        jnp.dot(h1.astype(cdt), w2_ref[...], preferred_element_type=jnp.float32)
        + b2_ref[...]
    )
    logit = (
        jnp.dot(h2.astype(cdt), w3_ref[...], preferred_element_type=jnp.float32)
        + b3_ref[...]        # padded class columns carry -1e30 -> exp underflows to 0
    )

    # Numerically-stable softmax over the (lane-dense, padded) class dim.
    m = jnp.max(logit, axis=-1, keepdims=True)
    e = jnp.exp(logit - m)
    denom = jnp.sum(e, axis=-1, keepdims=True)
    out_ref[...] = (e * pl.reciprocal(denom, approx=approx_recip)).astype(out_ref.dtype)


def metanet_forward(hx, y, params, *, compute_dtype=jnp.float32, max_batch_tile=512):
    """Forward pass equivalent to MetaNet.forward(hx, y)."""
    cdt = jnp.dtype(compute_dtype)
    use_bf16 = cdt == jnp.dtype(jnp.bfloat16)

    cls_emb = params["cls_emb"].astype(jnp.float32)
    w1, b1 = params["w1"].astype(jnp.float32), params["b1"].astype(jnp.float32)
    w2, b2 = params["w2"].astype(jnp.float32), params["b2"].astype(jnp.float32)
    w3, b3 = params["w3"].astype(jnp.float32), params["b3"].astype(jnp.float32)

    B, hx_dim = hx.shape
    h_dim = w1.shape[1]
    num_classes = w3.shape[1]

    # Algebraic elimination of the gather/concat: fold cls_emb into W1's class half.
    emb_w1 = cls_emb @ w1[hx_dim:, :]            # [num_classes, h]
    w1_hx = w1[:hx_dim, :]                       # [hx_dim, h]

    # Pad the class dim (emb_w1 rows, w3/b3 cols, kernel output) to a lane-dense multiple of 128.
    nc_pad = _round_up(num_classes, 128)
    emb_w1_p = jnp.zeros((nc_pad, h_dim), jnp.float32).at[:num_classes].set(emb_w1)
    w3_p = jnp.zeros((h_dim, nc_pad), jnp.float32).at[:, :num_classes].set(w3)
    b3_p = jnp.full((1, nc_pad), -1e30, jnp.float32).at[:, :num_classes].set(b3)

    # Batch tiling: TB rows per grid step (sublane aligned); weights stay VMEM-resident.
    tb = min(max_batch_tile, _round_up(B, 8))
    b_pad = _round_up(B, tb)
    hx_p = jnp.pad(hx.astype(jnp.float32), ((0, b_pad - B), (0, 0)))
    y_p = jnp.pad(y.astype(jnp.int32), (0, b_pad - B)).reshape(b_pad, 1)

    # MXU operands in the requested compute dtype; biases / activations stay f32.
    w1_hx_c = w1_hx.astype(cdt)
    emb_w1_c = emb_w1_p.astype(cdt)
    w2_c = w2.astype(cdt)
    w3_c = w3_p.astype(cdt)

    grid = (b_pad // tb,)

    def _row_spec(arr):
        return pl.BlockSpec((tb, arr.shape[1]), lambda i: (i, 0))

    def _resident_spec(arr):
        return pl.BlockSpec(arr.shape, lambda i: (0, 0))

    operands = (hx_p, y_p, w1_hx_c, emb_w1_c, b1, w2_c, b2, w3_c, b3_p)
    in_specs = [
        _row_spec(hx_p),
        _row_spec(y_p),
        _resident_spec(w1_hx_c),
        _resident_spec(emb_w1_c),
        _resident_spec(b1),
        _resident_spec(w2_c),
        _resident_spec(b2),
        _resident_spec(w3_c),
        _resident_spec(b3_p),
    ]
    out_specs = pl.BlockSpec((tb, nc_pad), lambda i: (i, 0))

    flops = 2 * b_pad * h_dim * (hx_dim + nc_pad + h_dim + nc_pad)
    transcendentals = b_pad * (2 * h_dim + nc_pad)
    bytes_accessed = (sum(int(a.size) * a.dtype.itemsize for a in operands)
                      + b_pad * nc_pad * 4)

    kernel = functools.partial(metanet_kernel, approx_recip=use_bf16)

    out = pl.pallas_call(
        kernel,
        out_shape=jax.ShapeDtypeStruct((b_pad, nc_pad), jnp.float32),
        grid_spec=pltpu.PrefetchScalarGridSpec(
            num_scalar_prefetch=0,
            grid=grid,
            in_specs=in_specs,
            out_specs=out_specs,
        ),
        compiler_params=pltpu.CompilerParams(
            dimension_semantics=("parallel",),      # shard batch tiles across TCs on v7x
            vmem_limit_bytes=32 * 1024 * 1024,      # explicit; safe on v5e/v6e/v7x
        ),
        cost_estimate=pl.CostEstimate(
            flops=flops,
            transcendentals=transcendentals,
            bytes_accessed=bytes_accessed,
        ),
    )(*operands)

    return out[:B, :num_classes]


def init_metanet_params(key, hx_dim, cls_dim, h_dim, num_classes):
    """Deterministic init matching the PyTorch module's init_weights()."""
    in_dim = hx_dim + cls_dim
    k_emb, k1, k2, k3 = jax.random.split(key, 4)

    # xavier_uniform_ for embedding [num_classes, cls_dim]
    bound = math.sqrt(6.0 / (num_classes + cls_dim))
    cls_emb = jax.random.uniform(
        k_emb, (num_classes, cls_dim), jnp.float32, -bound, bound
    )

    # xavier_normal_ for linear weights (std = sqrt(2 / (fan_in + fan_out)))
    def xavier_normal(k, fan_in, fan_out):
        std = math.sqrt(2.0 / (fan_in + fan_out))
        # stored as [in, out] so the kernel computes x @ W
        return std * jax.random.normal(k, (fan_in, fan_out), jnp.float32)

    w1 = xavier_normal(k1, in_dim, h_dim)
    w2 = xavier_normal(k2, h_dim, h_dim)
    w3 = xavier_normal(k3, h_dim, num_classes)

    b1 = jnp.zeros((1, h_dim), jnp.float32)
    b2 = jnp.zeros((1, h_dim), jnp.float32)
    b3 = jnp.zeros((1, num_classes), jnp.float32)

    return {
        "cls_emb": cls_emb,
        "w1": w1, "b1": b1,
        "w2": w2, "b2": b2,
        "w3": w3, "b3": b3,
    }


def metanet_reference(hx, y, params):
    """Pure-JAX reference matching the PyTorch forward exactly."""
    y_emb = jnp.take(params["cls_emb"], y, axis=0)
    hin = jnp.concatenate([hx, y_emb], axis=-1)
    h = jnp.tanh(hin @ params["w1"] + params["b1"])
    h = jnp.tanh(h @ params["w2"] + params["b2"])
    logit = h @ params["w3"] + params["b3"]
    return jax.nn.softmax(logit, axis=-1)


# TODO(synk): MetaNet.get_alpha() (returns torch.zeros(1)) is not part of forward; not ported.

if __name__ == "__main__":
    B = 8
    hx_dim = 32
    cls_dim = 16
    h_dim = 32
    num_classes = 10

    key = jax.random.PRNGKey(0)
    k_params, k_hx, k_y = jax.random.split(key, 3)

    params = init_metanet_params(k_params, hx_dim, cls_dim, h_dim, num_classes)
    hx = jax.random.normal(k_hx, (B, hx_dim), jnp.float32)
    y = jax.random.randint(k_y, (B,), 0, num_classes, jnp.int32)

    ref = jax.block_until_ready(metanet_reference(hx, y, params))

    # f32 compute path: exact against the reference.
    out_f32 = jax.block_until_ready(
        metanet_forward(hx, y, params, compute_dtype=jnp.float32)
    )
    assert out_f32.shape == (B, num_classes), out_f32.shape
    assert jnp.allclose(out_f32, ref, atol=1e-5, rtol=1e-5), "f32 mismatch vs reference"
    assert jnp.allclose(jnp.sum(out_f32, axis=-1), 1.0, atol=1e-5)

    # bf16 compute path for the dots (MXU-friendly on v6e/v7x): looser tolerance.
    out_bf16 = jax.block_until_ready(
        metanet_forward(hx, y, params, compute_dtype=jnp.bfloat16)
    )
    assert out_bf16.shape == (B, num_classes), out_bf16.shape
    assert jnp.allclose(out_bf16, ref, atol=2e-2, rtol=2e-2), "bf16 mismatch vs reference"
    assert jnp.allclose(jnp.sum(out_bf16, axis=-1), 1.0, atol=2e-2)

    print("KERNEL_OK")
</pallas_src>

<mosaic_0001>
module attributes {stable_mosaic.version = 11 : i64} {
  func.func @metanet_kernel(%arg0: i32, %arg1: memref<8x32xf32, #tpu.memory_space<vmem>>, %arg2: memref<8x1xi32, #tpu.memory_space<vmem>>, %arg3: memref<32x32xf32, #tpu.memory_space<vmem>>, %arg4: memref<128x32xf32, #tpu.memory_space<vmem>>, %arg5: memref<1x32xf32, #tpu.memory_space<vmem>>, %arg6: memref<32x32xf32, #tpu.memory_space<vmem>>, %arg7: memref<1x32xf32, #tpu.memory_space<vmem>>, %arg8: memref<32x128xf32, #tpu.memory_space<vmem>>, %arg9: memref<1x128xf32, #tpu.memory_space<vmem>>, %arg10: memref<8x128xf32, #tpu.memory_space<vmem>>) attributes {dimension_semantics = [#tpu.dimension_semantics<parallel>], iteration_bounds = array<i64: 1>, scalar_prefetch = 0 : i64, scratch_operands = 0 : i64, tpu.core_type = #tpu.core_type<tc>, window_params = [{transform_indices = @transform_0, window_bounds = array<i64: 8, 32>}, {transform_indices = @transform_1, window_bounds = array<i64: 8, 1>}, {pipeline_mode = #tpu.pipeline_mode<synchronous>, transform_indices = @transform_2, window_bounds = array<i64: 32, 32>}, {pipeline_mode = #tpu.pipeline_mode<synchronous>, transform_indices = @transform_3, window_bounds = array<i64: 128, 32>}, {pipeline_mode = #tpu.pipeline_mode<synchronous>, transform_indices = @transform_4, window_bounds = array<i64: 1, 32>}, {pipeline_mode = #tpu.pipeline_mode<synchronous>, transform_indices = @transform_5, window_bounds = array<i64: 32, 32>}, {pipeline_mode = #tpu.pipeline_mode<synchronous>, transform_indices = @transform_6, window_bounds = array<i64: 1, 32>}, {pipeline_mode = #tpu.pipeline_mode<synchronous>, transform_indices = @transform_7, window_bounds = array<i64: 32, 128>}, {pipeline_mode = #tpu.pipeline_mode<synchronous>, transform_indices = @transform_8, window_bounds = array<i64: 1, 128>}, {transform_indices = @transform_9, window_bounds = array<i64: 8, 128>}]} {
    %c0 = arith.constant 0 : index
    %c0_0 = arith.constant 0 : index
    %0 = vector.load %arg2[%c0, %c0_0] : memref<8x1xi32, #tpu.memory_space<vmem>>, vector<8x1xi32>
    %1 = tpu.iota {dimensions = array<i32: 1>} : vector<8x128xi32>
    %2 = vector.broadcast %0 : vector<8x1xi32> to vector<8x128xi32>
    %3 = arith.cmpi eq, %2, %1 : vector<8x128xi32>
    %4 = arith.extui %3 : vector<8x128xi1> to vector<8x128xi32>
    %5 = arith.sitofp %4 : vector<8x128xi32> to vector<8x128xf32>
    %c0_1 = arith.constant 0 : index
    %c0_2 = arith.constant 0 : index
    %6 = vector.load %arg1[%c0_1, %c0_2] : memref<8x32xf32, #tpu.memory_space<vmem>>, vector<8x32xf32>
    %c0_3 = arith.constant 0 : index
    %c0_4 = arith.constant 0 : index
    %7 = vector.load %arg3[%c0_3, %c0_4] : memref<32x32xf32, #tpu.memory_space<vmem>>, vector<32x32xf32>
    %cst = arith.constant dense<0.000000e+00> : vector<8x32xf32>
    %8 = tpu.matmul %6, %7, %cst {dimension_numbers = #tpu.dot_dimension_numbers<[1], [0], [0], [1], [0, 0, 1, 1], [], []>} : vector<8x32xf32>, vector<32x32xf32>, vector<8x32xf32> -> vector<8x32xf32>
    %c0_5 = arith.constant 0 : index
    %c0_6 = arith.constant 0 : index
    %9 = vector.load %arg4[%c0_5, %c0_6] : memref<128x32xf32, #tpu.memory_space<vmem>>, vector<128x32xf32>
    %cst_7 = arith.constant dense<0.000000e+00> : vector<8x32xf32>
    %10 = tpu.matmul %5, %9, %cst_7 {dimension_numbers = #tpu.dot_dimension_numbers<[1], [0], [0], [1], [0, 0, 1, 1], [], []>} : vector<8x128xf32>, vector<128x32xf32>, vector<8x32xf32> -> vector<8x32xf32>
    %11 = arith.addf %8, %10 : vector<8x32xf32>
    %c0_8 = arith.constant 0 : index
    %c0_9 = arith.constant 0 : index
    %12 = vector.load %arg5[%c0_8, %c0_9] : memref<1x32xf32, #tpu.memory_space<vmem>>, vector<1x32xf32>
    %13 = vector.broadcast %12 : vector<1x32xf32> to vector<8x32xf32>
    %14 = arith.addf %11, %13 : vector<8x32xf32>
    %15 = math.tanh %14 : vector<8x32xf32>
    %c0_10 = arith.constant 0 : index
    %c0_11 = arith.constant 0 : index
    %16 = vector.load %arg6[%c0_10, %c0_11] : memref<32x32xf32, #tpu.memory_space<vmem>>, vector<32x32xf32>
    %cst_12 = arith.constant dense<0.000000e+00> : vector<8x32xf32>
    %17 = tpu.matmul %15, %16, %cst_12 {dimension_numbers = #tpu.dot_dimension_numbers<[1], [0], [0], [1], [0, 0, 1, 1], [], []>} : vector<8x32xf32>, vector<32x32xf32>, vector<8x32xf32> -> vector<8x32xf32>
    %c0_13 = arith.constant 0 : index
    %c0_14 = arith.constant 0 : index
    %18 = vector.load %arg7[%c0_13, %c0_14] : memref<1x32xf32, #tpu.memory_space<vmem>>, vector<1x32xf32>
    %19 = vector.broadcast %18 : vector<1x32xf32> to vector<8x32xf32>
    %20 = arith.addf %17, %19 : vector<8x32xf32>
    %21 = math.tanh %20 : vector<8x32xf32>
    %c0_15 = arith.constant 0 : index
    %c0_16 = arith.constant 0 : index
    %22 = vector.load %arg8[%c0_15, %c0_16] : memref<32x128xf32, #tpu.memory_space<vmem>>, vector<32x128xf32>
    %cst_17 = arith.constant dense<0.000000e+00> : vector<8x128xf32>
    %23 = tpu.matmul %21, %22, %cst_17 {dimension_numbers = #tpu.dot_dimension_numbers<[1], [0], [0], [1], [0, 0, 1, 1], [], []>} : vector<8x32xf32>, vector<32x128xf32>, vector<8x128xf32> -> vector<8x128xf32>
    %c0_18 = arith.constant 0 : index
    %c0_19 = arith.constant 0 : index
    %24 = vector.load %arg9[%c0_18, %c0_19] : memref<1x128xf32, #tpu.memory_space<vmem>>, vector<1x128xf32>
    %25 = vector.broadcast %24 : vector<1x128xf32> to vector<8x128xf32>
    %26 = arith.addf %23, %25 : vector<8x128xf32>
    %cst_20 = arith.constant dense<0xFF800000> : vector<8xf32>
    %27 = vector.multi_reduction <maximumf>, %26, %cst_20 [1] : vector<8x128xf32> to vector<8xf32>
    %28 = vector.shape_cast %27 : vector<8xf32> to vector<8x1xf32>
    %29 = vector.broadcast %28 : vector<8x1xf32> to vector<8x128xf32>
    %30 = arith.subf %26, %29 : vector<8x128xf32>
    %31 = math.exp %30 : vector<8x128xf32>
    %cst_21 = arith.constant dense<0.000000e+00> : vector<8xf32>
    %32 = vector.multi_reduction <add>, %31, %cst_21 [1] : vector<8x128xf32> to vector<8xf32>
    %33 = vector.shape_cast %32 : vector<8xf32> to vector<8x1xf32>
    %34 = tpu.reciprocal %33 : vector<8x1xf32> -> vector<8x1xf32>
    %35 = vector.broadcast %34 : vector<8x1xf32> to vector<8x128xf32>
    %36 = arith.mulf %31, %35 : vector<8x128xf32>
    %c0_22 = arith.constant 0 : index
    %c0_23 = arith.constant 0 : index
    %37 = vector.load %arg10[%c0_22, %c0_23] : memref<8x128xf32, #tpu.memory_space<vmem>>, vector<8x128xf32>
    tpu.vector_store %arg10[%c0_22, %c0_23], %36 {strides = array<i32>} : memref<8x128xf32, #tpu.memory_space<vmem>>, vector<8x128xf32>,
    return
  }
  func.func @transform_0(%arg0: i32) -> (i32, i32) {
    %c0_i32 = arith.constant 0 : i32
    %c0_i32_0 = arith.constant 0 : i32
    return %arg0, %c0_i32 : i32, i32
  }
  func.func @transform_1(%arg0: i32) -> (i32, i32) {
    %c0_i32 = arith.constant 0 : i32
    %c0_i32_0 = arith.constant 0 : i32
    return %arg0, %c0_i32 : i32, i32
  }
  func.func @transform_2(%arg0: i32) -> (i32, i32) {
    %c0_i32 = arith.constant 0 : i32
    %c0_i32_0 = arith.constant 0 : i32
    %c0_i32_1 = arith.constant 0 : i32
    return %c0_i32, %c0_i32_0 : i32, i32
  }
  func.func @transform_3(%arg0: i32) -> (i32, i32) {
    %c0_i32 = arith.constant 0 : i32
    %c0_i32_0 = arith.constant 0 : i32
    %c0_i32_1 = arith.constant 0 : i32
    return %c0_i32, %c0_i32_0 : i32, i32
  }
  func.func @transform_4(%arg0: i32) -> (i32, i32) {
    %c0_i32 = arith.constant 0 : i32
    %c0_i32_0 = arith.constant 0 : i32
    %c0_i32_1 = arith.constant 0 : i32
    return %c0_i32, %c0_i32_0 : i32, i32
  }
  func.func @transform_5(%arg0: i32) -> (i32, i32) {
    %c0_i32 = arith.constant 0 : i32
    %c0_i32_0 = arith.constant 0 : i32
    %c0_i32_1 = arith.constant 0 : i32
    return %c0_i32, %c0_i32_0 : i32, i32
  }
  func.func @transform_6(%arg0: i32) -> (i32, i32) {
    %c0_i32 = arith.constant 0 : i32
    %c0_i32_0 = arith.constant 0 : i32
    %c0_i32_1 = arith.constant 0 : i32
    return %c0_i32, %c0_i32_0 : i32, i32
  }
  func.func @transform_7(%arg0: i32) -> (i32, i32) {
    %c0_i32 = arith.constant 0 : i32
    %c0_i32_0 = arith.constant 0 : i32
    %c0_i32_1 = arith.constant 0 : i32
    return %c0_i32, %c0_i32_0 : i32, i32
  }
  func.func @transform_8(%arg0: i32) -> (i32, i32) {
    %c0_i32 = arith.constant 0 : i32
    %c0_i32_0 = arith.constant 0 : i32
    %c0_i32_1 = arith.constant 0 : i32
    return %c0_i32, %c0_i32_0 : i32, i32
  }
  func.func @transform_9(%arg0: i32) -> (i32, i32) {
    %c0_i32 = arith.constant 0 : i32
    %c0_i32_0 = arith.constant 0 : i32
    return %arg0, %c0_i32 : i32, i32
  }
}

</mosaic_0001>

<llo_original>
// kernel: tpu_custom_call.1
$region0: #{tpu_custom_call.1}
  #allocation0 [shape = 'u32[]', space=smem, size = 0x4, offset = 0x4, fixed_abs, tag = 'smem constant byte address 0x4 - core index']
  #allocation1 [shape = 'u32[144,128]{1,0:T(1,128)}', space=vmem, size = 0x12000, scoped, tag = 'internal scratch']
  %s0 = inlined_call_operand.vmem [shape: f32[8,32], index: 0, kind: input, shape index: {}]
  %s1 = inlined_call_operand.vmem [shape: s32[8,1], index: 1, kind: input, shape index: {}]
  %s2 = inlined_call_operand.vmem [shape: f32[32,32], index: 2, kind: input, shape index: {}]
  %s3 = inlined_call_operand.vmem [shape: f32[128,32], index: 3, kind: input, shape index: {}]
  %s4 = inlined_call_operand.vmem [shape: f32[1,32], index: 4, kind: input, shape index: {}]
  %s5 = inlined_call_operand.vmem [shape: f32[32,32], index: 5, kind: input, shape index: {}]
  %s6 = inlined_call_operand.vmem [shape: f32[1,32], index: 6, kind: input, shape index: {}]
  %s7 = inlined_call_operand.vmem [shape: f32[32,128], index: 7, kind: input, shape index: {}]
  %s8 = inlined_call_operand.vmem [shape: f32[1,128], index: 8, kind: input, shape index: {}]
  %s9 = inlined_call_operand.hbm [shape: f32[8,128], index: 9, kind: output, shape index: {}]
  %s10 = sld [smem:[#allocation0]]
  $region46: #{tpu_custom_call.1} parent=0
    _
  %s12 = ssub.s32 1, %s10
  %s13 = scalar_select 0, %s12, %s10
  $region1: #{tpu_custom_call.1} parent=0
    #allocation2 [shape = 'u8[4096]{0}', space=vmem, size = 0x1000, scoped, tag = 'output window, operand 0, single buffered']
    #allocation3 [shape = 's32[1]{0}', space=sflag, size = 0x4, scoped, tag = 'scoped memory for tpu_custom_call.1']
    %14 = vsyncpa [#allocation3], 0
    // Predicated region
    $region2: #{tpu_custom_call.1} parent=1 // pred_check
      _
    $region3: #{tpu_custom_call.1} parent=1 // pred_check_branch
      %16 = sbr.rel (0) target = $region5
    $region4: #{tpu_custom_call.1} parent=1 // pred_region
      _
    $region5: #{tpu_custom_call.1} parent=1 // pred_fallthru
      _
    // Predicated region
    $region6: #{tpu_custom_call.1} parent=1 // pred_check
      _
    $region7: #{tpu_custom_call.1} parent=1 // pred_check_branch
      %18 = sbr.rel (0) target = $region9
    $region8: #{tpu_custom_call.1} parent=1 // pred_region
      _
    $region9: #{tpu_custom_call.1} parent=1 // pred_fallthru
      _
    // Predicated region
    $region10: #{tpu_custom_call.1} parent=1 // pred_check
      _
    $region11: #{tpu_custom_call.1} parent=1 // pred_check_branch
      %20 = sbr.rel (0) target = $region13
    $region12: #{tpu_custom_call.1} parent=1 // pred_region
      _
    $region13: #{tpu_custom_call.1} parent=1 // pred_fallthru
      _
    // Predicated region
    $region14: #{tpu_custom_call.1} parent=1 // pred_check
      _
    $region15: #{tpu_custom_call.1} parent=1 // pred_check_branch
      %22 = sbr.rel (0) target = $region17
    $region16: #{tpu_custom_call.1} parent=1 // pred_region
      _
    $region17: #{tpu_custom_call.1} parent=1 // pred_fallthru
      _
    // Predicated region
    $region18: #{tpu_custom_call.1} parent=1 // pred_check
      _
    $region19: #{tpu_custom_call.1} parent=1 // pred_check_branch
      %24 = sbr.rel (0) target = $region21
    $region20: #{tpu_custom_call.1} parent=1 // pred_region
      _
    $region21: #{tpu_custom_call.1} parent=1 // pred_fallthru
      _
    // Predicated region
    $region22: #{tpu_custom_call.1} parent=1 // pred_check
      _
    $region23: #{tpu_custom_call.1} parent=1 // pred_check_branch
      %26 = sbr.rel (0) target = $region25
    $region24: #{tpu_custom_call.1} parent=1 // pred_region
      _
    $region25: #{tpu_custom_call.1} parent=1 // pred_fallthru
      _
    // Predicated region
    $region26: #{tpu_custom_call.1} parent=1 // pred_check
      _
    $region27: #{tpu_custom_call.1} parent=1 // pred_check_branch
      %28 = sbr.rel (0) target = $region29
    $region28: #{tpu_custom_call.1} parent=1 // pred_region
      _
    $region29: #{tpu_custom_call.1} parent=1 // pred_fallthru
      _
    // Predicated region
    $region30: #{tpu_custom_call.1} parent=1 // pred_check
      _
    $region31: #{tpu_custom_call.1} parent=1 // pred_check_branch
      %30 = sbr.rel (0) target = $region33
    $region32: #{tpu_custom_call.1} parent=1 // pred_region
      _
    $region33: #{tpu_custom_call.1} parent=1 // pred_fallthru
      _
    // Predicated region
    $region34: #{tpu_custom_call.1} parent=1 // pred_check
      _
    $region35: #{tpu_custom_call.1} parent=1 // pred_check_branch
      %32 = sbr.rel (0) target = $region37
    $region36: #{tpu_custom_call.1} parent=1 // pred_region
      _
    $region37: #{tpu_custom_call.1} parent=1 // pred_fallthru
      _
    %v33 = vld [vmem:[%s1] sm:$0xff]
    %v34 = vlaneseq
    %v35 = vand.u32 %v34, 127
    %36 = vset.pattern.permute.xlu0 0
    %37 = vperm.xlu0 %36, %v33
    %v38 = vpop.permute.xlu0 %37
    %vm39 = vcmp.eq.s32.totalorder %v38, %v35
    %v40 = vsel %vm39, 1, 0
    %v41 = vcvt.s32.f32 %v40
    %v42 = vld [vmem:[%s0] sm:$0xff]
    %v43 = vld [vmem:[%s2] sm:$0xff]
    %v44 = vld [vmem:[%s2 + $0x8] sm:$0xff]
    %v45 = vld [vmem:[%s2 + $0x10] sm:$0xff]
    %v46 = vld [vmem:[%s2 + $0x18] sm:$0xff]
    %v47 = vld [vmem:[%s3] sm:$0xff]
    %v48 = vld [vmem:[%s3 + $0x8] sm:$0xff]
    %v49 = vld [vmem:[%s3 + $0x10] sm:$0xff]
    %v50 = vld [vmem:[%s3 + $0x18] sm:$0xff]
    %v51 = vld [vmem:[%s3 + $0x20] sm:$0xff]
    %v52 = vld [vmem:[%s3 + $0x28] sm:$0xff]
    %v53 = vld [vmem:[%s3 + $0x30] sm:$0xff]
    %v54 = vld [vmem:[%s3 + $0x38] sm:$0xff]
    %v55 = vld [vmem:[%s3 + $0x40] sm:$0xff]
    %v56 = vld [vmem:[%s3 + $0x48] sm:$0xff]
    %v57 = vld [vmem:[%s3 + $0x50] sm:$0xff]
    %v58 = vld [vmem:[%s3 + $0x58] sm:$0xff]
    %v59 = vld [vmem:[%s3 + $0x60] sm:$0xff]
    %v60 = vld [vmem:[%s3 + $0x68] sm:$0xff]
    %v61 = vld [vmem:[%s3 + $0x70] sm:$0xff]
    %v62 = vld [vmem:[%s3 + $0x78] sm:$0xff]
    %63 = vmatprep.subr.mxu0 0.0
    %64 = vmatpush1.msra.mxu0 %v47
    %65 = vmatprep.subr.mxu0 0.0
    %66 = vmatpush1.msra.mxu0 %v48
    %67 = vmatprep.subr.mxu0 0.0
    %68 = vmatpush1.msra.mxu0 %v49
    %69 = vmatprep.subr.mxu0 0.0
    %70 = vmatpush1.msra.mxu0 %v50
    %71 = vmatprep.subr.mxu0 0.0
    %72 = vmatpush1.msra.mxu0 %v51
    %73 = vmatprep.subr.mxu0 0.0
    %74 = vmatpush1.msra.mxu0 %v52
    %75 = vmatprep.subr.mxu0 0.0
    %76 = vmatpush1.msra.mxu0 %v53
    %77 = vmatprep.subr.mxu0 0.0
    %78 = vmatpush1.msra.mxu0 %v54
    %79 = vmatprep.subr.mxu0 0.0
    %80 = vmatpush1.msra.mxu0 %v55
    %81 = vmatprep.subr.mxu0 0.0
    %82 = vmatpush1.msra.mxu0 %v56
    %83 = vmatprep.subr.mxu0 0.0
    %84 = vmatpush1.msra.mxu0 %v57
    %85 = vmatprep.subr.mxu0 0.0
    %86 = vmatpush1.msra.mxu0 %v58
    %87 = vmatprep.subr.mxu0 0.0
    %88 = vmatpush1.msra.mxu0 %v59
    %89 = vmatprep.subr.mxu0 0.0
    %90 = vmatpush1.msra.mxu0 %v60
    %91 = vmatprep.subr.mxu0 0.0
    %92 = vmatpush1.msra.mxu0 %v61
    %93 = vmatprep.subr.mxu0 0.0
    %94 = vmatpush1.msra.mxu0 %v62
    %95 = vmatprep.subr.mxu0 0.0
    %96 = vmatpush1.msra.mxu0 0.0
    %97 = vmatprep.subr.mxu0 0.0
    %98 = vmatpush1.msra.mxu0 0.0
    %99 = vmatprep.subr.mxu0 0.0
    %100 = vmatpush1.msra.mxu0 0.0
    %101 = vmatprep.subr.mxu0 0.0
    %102 = vmatpush1.msra.mxu0 0.0
    %103 = vmatprep.subr.mxu0 0.0
    %104 = vmatpush1.msra.mxu0 0.0
    %105 = vmatprep.subr.mxu0 0.0
    %106 = vmatpush1.msra.mxu0 0.0
    %107 = vmatprep.subr.mxu0 0.0
    %108 = vmatpush1.msra.mxu0 0.0
    %109 = vmatprep.subr.mxu0 0.0
    %110 = vmatpush1.msra.mxu0 0.0
    %111 = vmatprep.subr.mxu0 0.0
    %112 = vmatpush1.msra.mxu0 0.0
    %113 = vmatprep.subr.mxu0 0.0
    %114 = vmatpush1.msra.mxu0 0.0
    %115 = vmatprep.subr.mxu0 0.0
    %116 = vmatpush1.msra.mxu0 0.0
    %117 = vmatprep.subr.mxu0 0.0
    %118 = vmatpush1.msra.mxu0 0.0
    %119 = vmatprep.subr.mxu0 0.0
    %120 = vmatpush1.msra.mxu0 0.0
    %121 = vmatprep.subr.mxu0 0.0
    %122 = vmatpush1.msra.mxu0 0.0
    %123 = vmatprep.subr.mxu0 0.0
    %124 = vmatpush1.msra.mxu0 0.0
    %125 = vmatprep.subr.mxu0 0.0
    %126 = vmatpush1.msra.mxu0 0.0
    %127 = vmatprep.mubr.f32.mxu0 0.0
    %128 = vmatmul.mubr.f32.gmra.mrb[0].mxu0 %v41
    %v129 = vpop.f32.mrb[0].mxu0
    %v130 = vadd.f32 0.0, %v129
    %v131 = vpop.f32.mrb[0].mxu0
    %132 = vdwg.mxu0
    %vm133 = vcmask 261120
    %v135 = vsel %vm133, %v42, 0
    %137 = vmatprep.subr.mxu0 0.0
    %138 = vmatpush1.msra.mxu0 %v43
    %139 = vmatprep.subr.mxu0 0.0
    %140 = vmatpush1.msra.mxu0 %v44
    %141 = vmatprep.subr.mxu0 0.0
    %142 = vmatpush1.msra.mxu0 %v45
    %143 = vmatprep.subr.mxu0 0.0
    %144 = vmatpush1.msra.mxu0 %v46
    %145 = vmatprep.subr.mxu0 0.0
    %146 = vmatpush1.msra.mxu0 0.0
    %147 = vmatprep.subr.mxu0 0.0
    %148 = vmatpush1.msra.mxu0 0.0
    %149 = vmatprep.subr.mxu0 0.0
    %150 = vmatpush1.msra.mxu0 0.0
    %151 = vmatprep.subr.mxu0 0.0
    %152 = vmatpush1.msra.mxu0 0.0
    %153 = vmatprep.subr.mxu0 0.0
    %154 = vmatpush1.msra.mxu0 0.0
    %155 = vmatprep.subr.mxu0 0.0
    %156 = vmatpush1.msra.mxu0 0.0
    %157 = vmatprep.subr.mxu0 0.0
    %158 = vmatpush1.msra.mxu0 0.0
    %159 = vmatprep.subr.mxu0 0.0
    %160 = vmatpush1.msra.mxu0 0.0
    %161 = vmatprep.subr.mxu0 0.0
    %162 = vmatpush1.msra.mxu0 0.0
    %163 = vmatprep.subr.mxu0 0.0
    %164 = vmatpush1.msra.mxu0 0.0
    %165 = vmatprep.subr.mxu0 0.0
    %166 = vmatpush1.msra.mxu0 0.0
    %167 = vmatprep.subr.mxu0 0.0
    %168 = vmatpush1.msra.mxu0 0.0
    %169 = vmatprep.subr.mxu0 0.0
    %170 = vmatpush1.msra.mxu0 0.0
    %171 = vmatprep.subr.mxu0 0.0
    %172 = vmatpush1.msra.mxu0 0.0
    %173 = vmatprep.subr.mxu0 0.0
    %174 = vmatpush1.msra.mxu0 0.0
    %175 = vmatprep.subr.mxu0 0.0
    %176 = vmatpush1.msra.mxu0 0.0
    %177 = vmatprep.subr.mxu0 0.0
    %178 = vmatpush1.msra.mxu0 0.0
    %179 = vmatprep.subr.mxu0 0.0
    %180 = vmatpush1.msra.mxu0 0.0
    %181 = vmatprep.subr.mxu0 0.0
    %182 = vmatpush1.msra.mxu0 0.0
    %183 = vmatprep.subr.mxu0 0.0
    %184 = vmatpush1.msra.mxu0 0.0
    %185 = vmatprep.subr.mxu0 0.0
    %186 = vmatpush1.msra.mxu0 0.0
    %187 = vmatprep.subr.mxu0 0.0
    %188 = vmatpush1.msra.mxu0 0.0
    %189 = vmatprep.subr.mxu0 0.0
    %190 = vmatpush1.msra.mxu0 0.0
    %191 = vmatprep.subr.mxu0 0.0
    %192 = vmatpush1.msra.mxu0 0.0
    %193 = vmatprep.subr.mxu0 0.0
    %194 = vmatpush1.msra.mxu0 0.0
    %195 = vmatprep.subr.mxu0 0.0
    %196 = vmatpush1.msra.mxu0 0.0
    %197 = vmatprep.subr.mxu0 0.0
    %198 = vmatpush1.msra.mxu0 0.0
    %199 = vmatprep.subr.mxu0 0.0
    %200 = vmatpush1.msra.mxu0 0.0
    %201 = vmatprep.mubr.f32.mxu0 0.0
    %202 = vmatmul.mubr.f32.gmra.mrb[0].mxu0 %v135
    %v203 = vpop.f32.mrb[0].mxu0
    %v204 = vadd.f32 %v130, %v203
    %v205 = vpop.f32.mrb[0].mxu0
    %206 = vdwg.mxu0
    %v207 = vld [vmem:[%s4] sm:$0x1]
    %v209 = vlaneseq
    %v210 = vshrl.u32 %v209, 7
    %v211 = vsub.s32 0, %v210
    %v212 = vrot.slane %v207, %v211
    %v214 = vadd.f32 %v204, %v212
    %v215 = vtanh.pop %v214
    %v216 = vld [vmem:[%s5] sm:$0xff]
    %v217 = vld [vmem:[%s5 + $0x8] sm:$0xff]
    %v218 = vld [vmem:[%s5 + $0x10] sm:$0xff]
    %v219 = vld [vmem:[%s5 + $0x18] sm:$0xff]
    %v220 = vld [vmem:[%s6] sm:$0x1]
    %v222 = vlaneseq
    %v223 = vshrl.u32 %v222, 7
    %v224 = vsub.s32 0, %v223
    %v225 = vrot.slane %v220, %v224
    %v228 = vsel %vm133, %v215, 0
    %230 = vmatprep.subr.mxu0 0.0
    %231 = vmatpush1.msra.mxu0 %v216
    %232 = vmatprep.subr.mxu0 0.0
    %233 = vmatpush1.msra.mxu0 %v217
    %234 = vmatprep.subr.mxu0 0.0
    %235 = vmatpush1.msra.mxu0 %v218
    %236 = vmatprep.subr.mxu0 0.0
    %237 = vmatpush1.msra.mxu0 %v219
    %238 = vmatprep.subr.mxu0 0.0
    %239 = vmatpush1.msra.mxu0 0.0
    %240 = vmatprep.subr.mxu0 0.0
    %241 = vmatpush1.msra.mxu0 0.0
    %242 = vmatprep.subr.mxu0 0.0
    %243 = vmatpush1.msra.mxu0 0.0
    %244 = vmatprep.subr.mxu0 0.0
    %245 = vmatpush1.msra.mxu0 0.0
    %246 = vmatprep.subr.mxu0 0.0
    %247 = vmatpush1.msra.mxu0 0.0
    %248 = vmatprep.subr.mxu0 0.0
    %249 = vmatpush1.msra.mxu0 0.0
    %250 = vmatprep.subr.mxu0 0.0
    %251 = vmatpush1.msra.mxu0 0.0
    %252 = vmatprep.subr.mxu0 0.0
    %253 = vmatpush1.msra.mxu0 0.0
    %254 = vmatprep.subr.mxu0 0.0
    %255 = vmatpush1.msra.mxu0 0.0
    %256 = vmatprep.subr.mxu0 0.0
    %257 = vmatpush1.msra.mxu0 0.0
    %258 = vmatprep.subr.mxu0 0.0
    %259 = vmatpush1.msra.mxu0 0.0
    %260 = vmatprep.subr.mxu0 0.0
    %261 = vmatpush1.msra.mxu0 0.0
    %262 = vmatprep.subr.mxu0 0.0
    %263 = vmatpush1.msra.mxu0 0.0
    %264 = vmatprep.subr.mxu0 0.0
    %265 = vmatpush1.msra.mxu0 0.0
    %266 = vmatprep.subr.mxu0 0.0
    %267 = vmatpush1.msra.mxu0 0.0
    %268 = vmatprep.subr.mxu0 0.0
    %269 = vmatpush1.msra.mxu0 0.0
    %270 = vmatprep.subr.mxu0 0.0
    %271 = vmatpush1.msra.mxu0 0.0
    %272 = vmatprep.subr.mxu0 0.0
    %273 = vmatpush1.msra.mxu0 0.0
    %274 = vmatprep.subr.mxu0 0.0
    %275 = vmatpush1.msra.mxu0 0.0
    %276 = vmatprep.subr.mxu0 0.0
    %277 = vmatpush1.msra.mxu0 0.0
    %278 = vmatprep.subr.mxu0 0.0
    %279 = vmatpush1.msra.mxu0 0.0
    %280 = vmatprep.subr.mxu0 0.0
    %281 = vmatpush1.msra.mxu0 0.0
    %282 = vmatprep.subr.mxu0 0.0
    %283 = vmatpush1.msra.mxu0 0.0
    %284 = vmatprep.subr.mxu0 0.0
    %285 = vmatpush1.msra.mxu0 0.0
    %286 = vmatprep.subr.mxu0 0.0
    %287 = vmatpush1.msra.mxu0 0.0
    %288 = vmatprep.subr.mxu0 0.0
    %289 = vmatpush1.msra.mxu0 0.0
    %290 = vmatprep.subr.mxu0 0.0
    %291 = vmatpush1.msra.mxu0 0.0
    %292 = vmatprep.subr.mxu0 0.0
    %293 = vmatpush1.msra.mxu0 0.0
    %294 = vmatprep.mubr.f32.mxu0 0.0
    %295 = vmatmul.mubr.f32.gmra.mrb[0].mxu0 %v228
    %v296 = vpop.f32.mrb[0].mxu0
    %v297 = vadd.f32 %v225, %v296
    %v298 = vpop.f32.mrb[0].mxu0
    %299 = vdwg.mxu0
    %v300 = vtanh.pop %v297
    %v301 = vld [vmem:[%s7] sm:$0xff]
    %v302 = vld [vmem:[%s7 + $0x8] sm:$0xff]
    %v303 = vld [vmem:[%s7 + $0x10] sm:$0xff]
    %v304 = vld [vmem:[%s7 + $0x18] sm:$0xff]
    %v305 = vld [vmem:[%s8] sm:$0x1]
    %v307 = vlaneseq
    %v308 = vshrl.u32 %v307, 7
    %v309 = vsub.s32 0, %v308
    %v310 = vrot.slane %v305, %v309
    %v313 = vsel %vm133, %v300, 0
    %315 = vmatprep.subr.mxu0 0.0
    %316 = vmatpush1.msra.mxu0 %v301
    %317 = vmatprep.subr.mxu0 0.0
    %318 = vmatpush1.msra.mxu0 %v302
    %319 = vmatprep.subr.mxu0 0.0
    %320 = vmatpush1.msra.mxu0 %v303
    %321 = vmatprep.subr.mxu0 0.0
    %322 = vmatpush1.msra.mxu0 %v304
    %323 = vmatprep.subr.mxu0 0.0
    %324 = vmatpush1.msra.mxu0 0.0
    %325 = vmatprep.subr.mxu0 0.0
    %326 = vmatpush1.msra.mxu0 0.0
    %327 = vmatprep.subr.mxu0 0.0
    %328 = vmatpush1.msra.mxu0 0.0
    %329 = vmatprep.subr.mxu0 0.0
    %330 = vmatpush1.msra.mxu0 0.0
    %331 = vmatprep.subr.mxu0 0.0
    %332 = vmatpush1.msra.mxu0 0.0
    %333 = vmatprep.subr.mxu0 0.0
    %334 = vmatpush1.msra.mxu0 0.0
    %335 = vmatprep.subr.mxu0 0.0
    %336 = vmatpush1.msra.mxu0 0.0
    %337 = vmatprep.subr.mxu0 0.0
    %338 = vmatpush1.msra.mxu0 0.0
    %339 = vmatprep.subr.mxu0 0.0
    %340 = vmatpush1.msra.mxu0 0.0
    %341 = vmatprep.subr.mxu0 0.0
    %342 = vmatpush1.msra.mxu0 0.0
    %343 = vmatprep.subr.mxu0 0.0
    %344 = vmatpush1.msra.mxu0 0.0
    %345 = vmatprep.subr.mxu0 0.0
    %346 = vmatpush1.msra.mxu0 0.0
    %347 = vmatprep.subr.mxu0 0.0
    %348 = vmatpush1.msra.mxu0 0.0
    %349 = vmatprep.subr.mxu0 0.0
    %350 = vmatpush1.msra.mxu0 0.0
    %351 = vmatprep.subr.mxu0 0.0
    %352 = vmatpush1.msra.mxu0 0.0
    %353 = vmatprep.subr.mxu0 0.0
    %354 = vmatpush1.msra.mxu0 0.0
    %355 = vmatprep.subr.mxu0 0.0
    %356 = vmatpush1.msra.mxu0 0.0
    %357 = vmatprep.subr.mxu0 0.0
    %358 = vmatpush1.msra.mxu0 0.0
    %359 = vmatprep.subr.mxu0 0.0
    %360 = vmatpush1.msra.mxu0 0.0
    %361 = vmatprep.subr.mxu0 0.0
    %362 = vmatpush1.msra.mxu0 0.0
    %363 = vmatprep.subr.mxu0 0.0
    %364 = vmatpush1.msra.mxu0 0.0
    %365 = vmatprep.subr.mxu0 0.0
    %366 = vmatpush1.msra.mxu0 0.0
    %367 = vmatprep.subr.mxu0 0.0
    %368 = vmatpush1.msra.mxu0 0.0
    %369 = vmatprep.subr.mxu0 0.0
    %370 = vmatpush1.msra.mxu0 0.0
    %371 = vmatprep.subr.mxu0 0.0
    %372 = vmatpush1.msra.mxu0 0.0
    %373 = vmatprep.subr.mxu0 0.0
    %374 = vmatpush1.msra.mxu0 0.0
    %375 = vmatprep.subr.mxu0 0.0
    %376 = vmatpush1.msra.mxu0 0.0
    %377 = vmatprep.subr.mxu0 0.0
    %378 = vmatpush1.msra.mxu0 0.0
    %379 = vmatprep.mubr.f32.mxu0 0.0
    %380 = vmatmul.mubr.f32.gmra.mrb[0].mxu0 %v313
    %v381 = vpop.f32.mrb[0].mxu0
    %v382 = vadd.f32 %v310, %v381
    %v383 = vpop.f32.mrb[0].mxu0
    %384 = vdwg.mxu0
    %385 = vmax.xlane.f32.xlu0 %v382
    %v386 = vpop.xlane.xlu0 %385
    %v387 = vsub.f32 %v382, %v386
    %v388 = vmul.f32 %v387, 1.442695
    %v389 = vpow.pop %v388
    %390 = vadd.xlane.f32.xlu0 %v389
    %v391 = vpop.xlane.xlu0 %390
    %v392 = vrcp.pop %v391
    %v393 = vmul.f32 %v389, %v392
    %394 = vst [vmem:[#allocation2] sm:$0xff] %v393
    // Predicated region
    $region38: #{tpu_custom_call.1} parent=1 // pred_check
      _
    $region39: #{tpu_custom_call.1} parent=1 // pred_check_branch
      %396 = sbr.rel (0) target = $region41
    $region40: #{tpu_custom_call.1} parent=1 // pred_region
      %s398 = ssub.s32 128, 128
      %399 = vsyncadd [#allocation3], %s398
      %s401 = sshll.u32 [#allocation2], 4
      %s402 = int_to_ptr.vmem [resolvable:$true] %s401
      %404 = dma.vmem_to_hbm [thread:$0]  %s402, 128, %s9, [#allocation3]
    $region41: #{tpu_custom_call.1} parent=1 // pred_fallthru
      _
    // Predicated region
    $region42: #{tpu_custom_call.1} parent=1 // pred_check
      _
    $region43: #{tpu_custom_call.1} parent=1 // pred_check_branch
      %406 = sbr.rel (0) target = $region45
    $region44: #{tpu_custom_call.1} parent=1 // pred_region
      %407 = dma.done [#allocation3], 128
    $region45: #{tpu_custom_call.1} parent=1 // pred_fallthru
      _
    %408 = vsyncpa [#allocation3], 1

</llo_original>
